<compile_context>
chip_gen: v7x
topology: tpu7x:2x2x1
jax: 0.10.0
libtpu: 0.0.40
codegen_flags: <defaults>
</compile_context>

<pallas_src>
import functools

import jax
import jax.numpy as jnp
import numpy as np
from jax.experimental import pallas as pl
from jax.experimental.pallas import tpu as pltpu

NUM_CLASSES = 3
SMOOTH = 1.0
_TARGET_BLOCK_BYTES = 6 << 20   # ~6 MiB of input data per grid step
_VMEM_LIMIT_BYTES = 32 << 20    # safe on v5e/v6e (128 MiB phys) and v7x (64 MiB phys)


def _iou_kernel(pr_ref, gt_ref, out_ref, *, hw, hw_pad, n_valid, n_pad, b_blk):
    # pr_ref: (b_blk, C*hw_pad)  logits, channels are contiguous 128-aligned lane blocks
    # gt_ref: (b_blk, hw_pad)    int32 class labels
    g = gt_ref[...]
    p0 = pr_ref[:, 0 * hw_pad:1 * hw_pad]
    p1 = pr_ref[:, 1 * hw_pad:2 * hw_pad]
    p2 = pr_ref[:, 2 * hw_pad:3 * hw_pad]

    # Channel argmax on raw logits (sigmoid is monotonic -> identical argmax),
    # numpy first-occurrence tie-breaking.
    am = jnp.where(p1 > p0, 1, 0)
    am = jnp.where(p2 > jnp.maximum(p0, p1), 2, am)          # (b_blk, hw_pad) int32

    eq = am == g

    # Pixel-padding mask (only when HW was padded up to a multiple of 128).
    if hw_pad != hw:
        pix_ok = jax.lax.broadcasted_iota(jnp.int32, (1, hw_pad), 1) < hw
    else:
        pix_ok = None

    # Sample-padding mask (only when N was padded up to a multiple of b_blk).
    if n_pad != n_valid:
        sid = pl.program_id(0) * b_blk + jax.lax.broadcasted_iota(
            jnp.int32, (b_blk, 1), 0)
        s_ok = (sid < n_valid).astype(jnp.float32)            # (b_blk, 1)
    else:
        s_ok = None

    iou_sum = jnp.zeros((b_blk, 1), jnp.float32)
    for c in range(NUM_CLASSES):                               # static unroll
        gm = g == c
        pm = am == c
        im = gm & eq                                           # intersection mask
        if pix_ok is not None:
            gm = gm & pix_ok
            pm = pm & pix_ok
            im = im & pix_ok
        inter = jnp.sum(im.astype(jnp.float32), axis=-1, keepdims=True)   # (b_blk, 1)
        ts = jnp.sum(gm.astype(jnp.float32), axis=-1, keepdims=True)
        ps = jnp.sum(pm.astype(jnp.float32), axis=-1, keepdims=True)
        union = ts + ps - inter
        iou_sum = iou_sum + (inter + SMOOTH) / (union + SMOOTH)

    if s_ok is not None:
        iou_sum = iou_sum * s_ok

    partial = jnp.sum(iou_sum, axis=(0, 1), keepdims=True)     # (1, 1)

    # Lane-padded per-block partial: value at [0,0], zeros elsewhere.  Each grid
    # step owns a distinct (8,128) output block, so the batch axis is "parallel".
    row = jax.lax.broadcasted_iota(jnp.int32, (8, 128), 0)
    col = jax.lax.broadcasted_iota(jnp.int32, (8, 128), 1)
    out_ref[...] = jnp.where((row == 0) & (col == 0), partial, 0.0)


def _pick_block(n, per_sample_bytes):
    """Samples per grid step: whole batch if small, else ~_TARGET_BLOCK_BYTES,
    preferring a multiple of 8 that divides N (avoids the batch-padding HBM copy)."""
    if n * per_sample_bytes <= _TARGET_BLOCK_BYTES:
        return n
    cap = max(8, (_TARGET_BLOCK_BYTES // per_sample_bytes) // 8 * 8)
    for cand in range(cap, 7, -8):        # prefer exact divisors of N
        if n % cand == 0:
            return cand
    return cap                            # fallback: pad the batch


def iou_metric(y_pr, y_gt):
    """y_pr: (N, 3, H, W) float logits; y_gt: (N, H, W) int class labels. Scalar f32."""
    N, C, H, W = y_pr.shape
    assert C == NUM_CLASSES, "reference hard-codes num_classes=3"
    HW = H * W
    hw_pad = -(-HW // 128) * 128

    pr = y_pr.reshape(N, C, HW)
    gt = y_gt.reshape(N, HW).astype(jnp.int32)

    pr_bytes = jnp.dtype(pr.dtype).itemsize
    per_sample_bytes = C * hw_pad * pr_bytes + hw_pad * 4

    b_blk = _pick_block(N, per_sample_bytes)
    n_pad = -(-N // b_blk) * b_blk
    grid_n = n_pad // b_blk

    if hw_pad != HW:
        pr = jnp.pad(pr, ((0, 0), (0, 0), (0, hw_pad - HW)))
        gt = jnp.pad(gt, ((0, 0), (0, hw_pad - HW)))
    if n_pad != N:
        pr = jnp.pad(pr, ((0, n_pad - N), (0, 0), (0, 0)))
        gt = jnp.pad(gt, ((0, n_pad - N), (0, 0)))

    pr = pr.reshape(n_pad, C * hw_pad)   # lane-dense: channel c -> lanes [c*hw_pad, (c+1)*hw_pad)

    kernel = functools.partial(
        _iou_kernel, hw=HW, hw_pad=hw_pad, n_valid=N, n_pad=n_pad, b_blk=b_blk)

    cost = pl.CostEstimate(
        flops=25 * N * HW,
        transcendentals=0,
        bytes_accessed=n_pad * per_sample_bytes + grid_n * 8 * 128 * 4,
    )

    partials = pl.pallas_call(
        kernel,
        out_shape=jax.ShapeDtypeStruct((grid_n * 8, 128), jnp.float32),
        grid_spec=pltpu.PrefetchScalarGridSpec(
            num_scalar_prefetch=0,
            grid=(grid_n,),
            in_specs=[
                pl.BlockSpec((b_blk, C * hw_pad), lambda i: (i, 0)),
                pl.BlockSpec((b_blk, hw_pad), lambda i: (i, 0)),
            ],
            out_specs=pl.BlockSpec((8, 128), lambda i: (i, 0)),
        ),
        compiler_params=pltpu.CompilerParams(
            dimension_semantics=("parallel",),
            vmem_limit_bytes=_VMEM_LIMIT_BYTES,
        ),
        cost_estimate=cost,
    )(pr, gt)

    return jnp.sum(partials) / jnp.float32(NUM_CLASSES * N)


# ---------------- numpy reference (mirrors the PyTorch/numpy code) ----------------
def _to_categorical_np(y, num_classes):
    y = np.array(y, dtype="int")
    shape = y.shape
    yf = y.ravel()
    cat = np.zeros((yf.shape[0], num_classes), dtype="float32")
    cat[np.arange(yf.shape[0]), yf] = 1
    return cat.reshape(shape + (num_classes,))


def _iou_ref(pr, gt):
    pr = 1.0 / (1.0 + np.exp(-pr.astype(np.float64)))  # sigmoid (monotonic)
    pr = np.argmax(pr, axis=1)
    pr = _to_categorical_np(pr, NUM_CLASSES)
    gt = _to_categorical_np(gt, NUM_CLASSES)
    iou_all = 0.0
    for i in range(NUM_CLASSES):
        rt = gt[:, :, :, i:i + 1].astype(np.float64)
        rp = pr[:, :, :, i:i + 1].astype(np.float64)
        inter = np.sum(np.abs(rt * rp), axis=(1, 2, 3))
        union = np.sum(rt, axis=(1, 2, 3)) + np.sum(rp, axis=(1, 2, 3)) - inter
        iou_all += np.mean((inter + 1.0) / (union + 1.0), axis=0)
    return iou_all / NUM_CLASSES


if __name__ == "__main__":
    key = jax.random.PRNGKey(0)
    k1, k2 = jax.random.split(key)
    N, C, H, W = 2, 3, 16, 16
    y_pr = jax.random.normal(k1, (N, C, H, W), dtype=jnp.float32)
    y_gt = jax.random.randint(k2, (N, H, W), 0, NUM_CLASSES, dtype=jnp.int32)

    result = jax.block_until_ready(iou_metric(y_pr, y_gt))

    expected = _iou_ref(np.asarray(y_pr), np.asarray(y_gt))
    assert abs(float(result) - float(expected)) < 1e-5, (result, expected)
    print("KERNEL_OK")
</pallas_src>

<mosaic_0001>
module attributes {stable_mosaic.version = 11 : i64} {
  func.func @_iou_kernel(%arg0: i32, %arg1: memref<2x768xf32, #tpu.memory_space<vmem>>, %arg2: memref<2x256xi32, #tpu.memory_space<vmem>>, %arg3: memref<8x128xf32, #tpu.memory_space<vmem>>) attributes {dimension_semantics = [#tpu.dimension_semantics<parallel>], iteration_bounds = array<i64: 1>, scalar_prefetch = 0 : i64, scratch_operands = 0 : i64, tpu.core_type = #tpu.core_type<tc>, window_params = [{transform_indices = @transform_0, window_bounds = array<i64: 2, 768>}, {transform_indices = @transform_1, window_bounds = array<i64: 2, 256>}, {transform_indices = @transform_2, window_bounds = array<i64: 8, 128>}]} {
    %c0 = arith.constant 0 : index
    %c0_0 = arith.constant 0 : index
    %0 = vector.load %arg2[%c0, %c0_0] : memref<2x256xi32, #tpu.memory_space<vmem>>, vector<2x256xi32>
    %c0_1 = arith.constant 0 : index
    %c0_2 = arith.constant 0 : index
    %1 = vector.load %arg1[%c0_1, %c0_2] : memref<2x768xf32, #tpu.memory_space<vmem>>, vector<2x256xf32>
    %c0_3 = arith.constant 0 : index
    %c256 = arith.constant 256 : index
    %2 = vector.load %arg1[%c0_3, %c256] : memref<2x768xf32, #tpu.memory_space<vmem>>, vector<2x256xf32>
    %c0_4 = arith.constant 0 : index
    %c512 = arith.constant 512 : index
    %3 = vector.load %arg1[%c0_4, %c512] : memref<2x768xf32, #tpu.memory_space<vmem>>, vector<2x256xf32>
    %4 = arith.cmpf ogt, %2, %1 : vector<2x256xf32>
    %c1_i32 = arith.constant 1 : i32
    %c0_i32 = arith.constant 0 : i32
    %5 = vector.broadcast %c1_i32 : i32 to vector<2x256xi32>
    %6 = vector.broadcast %c0_i32 : i32 to vector<2x256xi32>
    %7 = arith.select %4, %5, %6 : vector<2x256xi1>, vector<2x256xi32>
    %8 = arith.maximumf %1, %2 : vector<2x256xf32>
    %9 = arith.cmpf ogt, %3, %8 : vector<2x256xf32>
    %c2_i32 = arith.constant 2 : i32
    %10 = vector.broadcast %c2_i32 : i32 to vector<2x256xi32>
    %11 = arith.select %9, %10, %7 : vector<2x256xi1>, vector<2x256xi32>
    %12 = arith.cmpi eq, %11, %0 : vector<2x256xi32>
    %cst = arith.constant 0.000000e+00 : f32
    %13 = vector.broadcast %cst : f32 to vector<2x1xf32>
    %c0_i32_5 = arith.constant 0 : i32
    %14 = vector.broadcast %c0_i32_5 : i32 to vector<2x256xi32>
    %15 = arith.cmpi eq, %0, %14 : vector<2x256xi32>
    %c0_i32_6 = arith.constant 0 : i32
    %16 = vector.broadcast %c0_i32_6 : i32 to vector<2x256xi32>
    %17 = arith.cmpi eq, %11, %16 : vector<2x256xi32>
    %18 = arith.andi %15, %12 : vector<2x256xi1>
    %19 = arith.extui %18 : vector<2x256xi1> to vector<2x256xi32>
    %20 = arith.sitofp %19 : vector<2x256xi32> to vector<2x256xf32>
    %cst_7 = arith.constant dense<0.000000e+00> : vector<2xf32>
    %21 = vector.multi_reduction <add>, %20, %cst_7 [1] : vector<2x256xf32> to vector<2xf32>
    %22 = vector.shape_cast %21 : vector<2xf32> to vector<2x1xf32>
    %23 = arith.extui %15 : vector<2x256xi1> to vector<2x256xi32>
    %24 = arith.sitofp %23 : vector<2x256xi32> to vector<2x256xf32>
    %cst_8 = arith.constant dense<0.000000e+00> : vector<2xf32>
    %25 = vector.multi_reduction <add>, %24, %cst_8 [1] : vector<2x256xf32> to vector<2xf32>
    %26 = vector.shape_cast %25 : vector<2xf32> to vector<2x1xf32>
    %27 = arith.extui %17 : vector<2x256xi1> to vector<2x256xi32>
    %28 = arith.sitofp %27 : vector<2x256xi32> to vector<2x256xf32>
    %cst_9 = arith.constant dense<0.000000e+00> : vector<2xf32>
    %29 = vector.multi_reduction <add>, %28, %cst_9 [1] : vector<2x256xf32> to vector<2xf32>
    %30 = vector.shape_cast %29 : vector<2xf32> to vector<2x1xf32>
    %31 = arith.addf %26, %30 : vector<2x1xf32>
    %32 = arith.subf %31, %22 : vector<2x1xf32>
    %cst_10 = arith.constant 1.000000e+00 : f32
    %33 = vector.broadcast %cst_10 : f32 to vector<2x1xf32>
    %34 = arith.addf %22, %33 : vector<2x1xf32>
    %cst_11 = arith.constant 1.000000e+00 : f32
    %35 = vector.broadcast %cst_11 : f32 to vector<2x1xf32>
    %36 = arith.addf %32, %35 : vector<2x1xf32>
    %37 = arith.divf %34, %36 : vector<2x1xf32>
    %38 = arith.addf %13, %37 : vector<2x1xf32>
    %c1_i32_12 = arith.constant 1 : i32
    %39 = vector.broadcast %c1_i32_12 : i32 to vector<2x256xi32>
    %40 = arith.cmpi eq, %0, %39 : vector<2x256xi32>
    %c1_i32_13 = arith.constant 1 : i32
    %41 = vector.broadcast %c1_i32_13 : i32 to vector<2x256xi32>
    %42 = arith.cmpi eq, %11, %41 : vector<2x256xi32>
    %43 = arith.andi %40, %12 : vector<2x256xi1>
    %44 = arith.extui %43 : vector<2x256xi1> to vector<2x256xi32>
    %45 = arith.sitofp %44 : vector<2x256xi32> to vector<2x256xf32>
    %cst_14 = arith.constant dense<0.000000e+00> : vector<2xf32>
    %46 = vector.multi_reduction <add>, %45, %cst_14 [1] : vector<2x256xf32> to vector<2xf32>
    %47 = vector.shape_cast %46 : vector<2xf32> to vector<2x1xf32>
    %48 = arith.extui %40 : vector<2x256xi1> to vector<2x256xi32>
    %49 = arith.sitofp %48 : vector<2x256xi32> to vector<2x256xf32>
    %cst_15 = arith.constant dense<0.000000e+00> : vector<2xf32>
    %50 = vector.multi_reduction <add>, %49, %cst_15 [1] : vector<2x256xf32> to vector<2xf32>
    %51 = vector.shape_cast %50 : vector<2xf32> to vector<2x1xf32>
    %52 = arith.extui %42 : vector<2x256xi1> to vector<2x256xi32>
    %53 = arith.sitofp %52 : vector<2x256xi32> to vector<2x256xf32>
    %cst_16 = arith.constant dense<0.000000e+00> : vector<2xf32>
    %54 = vector.multi_reduction <add>, %53, %cst_16 [1] : vector<2x256xf32> to vector<2xf32>
    %55 = vector.shape_cast %54 : vector<2xf32> to vector<2x1xf32>
    %56 = arith.addf %51, %55 : vector<2x1xf32>
    %57 = arith.subf %56, %47 : vector<2x1xf32>
    %cst_17 = arith.constant 1.000000e+00 : f32
    %58 = vector.broadcast %cst_17 : f32 to vector<2x1xf32>
    %59 = arith.addf %47, %58 : vector<2x1xf32>
    %cst_18 = arith.constant 1.000000e+00 : f32
    %60 = vector.broadcast %cst_18 : f32 to vector<2x1xf32>
    %61 = arith.addf %57, %60 : vector<2x1xf32>
    %62 = arith.divf %59, %61 : vector<2x1xf32>
    %63 = arith.addf %38, %62 : vector<2x1xf32>
    %c2_i32_19 = arith.constant 2 : i32
    %64 = vector.broadcast %c2_i32_19 : i32 to vector<2x256xi32>
    %65 = arith.cmpi eq, %0, %64 : vector<2x256xi32>
    %c2_i32_20 = arith.constant 2 : i32
    %66 = vector.broadcast %c2_i32_20 : i32 to vector<2x256xi32>
    %67 = arith.cmpi eq, %11, %66 : vector<2x256xi32>
    %68 = arith.andi %65, %12 : vector<2x256xi1>
    %69 = arith.extui %68 : vector<2x256xi1> to vector<2x256xi32>
    %70 = arith.sitofp %69 : vector<2x256xi32> to vector<2x256xf32>
    %cst_21 = arith.constant dense<0.000000e+00> : vector<2xf32>
    %71 = vector.multi_reduction <add>, %70, %cst_21 [1] : vector<2x256xf32> to vector<2xf32>
    %72 = vector.shape_cast %71 : vector<2xf32> to vector<2x1xf32>
    %73 = arith.extui %65 : vector<2x256xi1> to vector<2x256xi32>
    %74 = arith.sitofp %73 : vector<2x256xi32> to vector<2x256xf32>
    %cst_22 = arith.constant dense<0.000000e+00> : vector<2xf32>
    %75 = vector.multi_reduction <add>, %74, %cst_22 [1] : vector<2x256xf32> to vector<2xf32>
    %76 = vector.shape_cast %75 : vector<2xf32> to vector<2x1xf32>
    %77 = arith.extui %67 : vector<2x256xi1> to vector<2x256xi32>
    %78 = arith.sitofp %77 : vector<2x256xi32> to vector<2x256xf32>
    %cst_23 = arith.constant dense<0.000000e+00> : vector<2xf32>
    %79 = vector.multi_reduction <add>, %78, %cst_23 [1] : vector<2x256xf32> to vector<2xf32>
    %80 = vector.shape_cast %79 : vector<2xf32> to vector<2x1xf32>
    %81 = arith.addf %76, %80 : vector<2x1xf32>
    %82 = arith.subf %81, %72 : vector<2x1xf32>
    %cst_24 = arith.constant 1.000000e+00 : f32
    %83 = vector.broadcast %cst_24 : f32 to vector<2x1xf32>
    %84 = arith.addf %72, %83 : vector<2x1xf32>
    %cst_25 = arith.constant 1.000000e+00 : f32
    %85 = vector.broadcast %cst_25 : f32 to vector<2x1xf32>
    %86 = arith.addf %82, %85 : vector<2x1xf32>
    %87 = arith.divf %84, %86 : vector<2x1xf32>
    %88 = arith.addf %63, %87 : vector<2x1xf32>
    %89 = vector.shape_cast %88 : vector<2x1xf32> to vector<1x2x1xf32>
    %cst_26 = arith.constant dense<0.000000e+00> : vector<1xf32>
    %90 = vector.multi_reduction <add>, %89, %cst_26 [1, 2] : vector<1x2x1xf32> to vector<1xf32>
    %91 = vector.shape_cast %90 : vector<1xf32> to vector<1x1x1xf32>
    %92 = vector.extract %91[0, 0, 0] : f32 from vector<1x1x1xf32>
    %93 = vector.broadcast %92 : f32 to vector<1x1xf32>
    %94 = tpu.iota {dimensions = array<i32: 0>} : vector<8x128xi32>
    %95 = tpu.iota {dimensions = array<i32: 1>} : vector<8x128xi32>
    %c0_i32_27 = arith.constant 0 : i32
    %96 = vector.broadcast %c0_i32_27 : i32 to vector<8x128xi32>
    %97 = arith.cmpi eq, %94, %96 : vector<8x128xi32>
    %c0_i32_28 = arith.constant 0 : i32
    %98 = vector.broadcast %c0_i32_28 : i32 to vector<8x128xi32>
    %99 = arith.cmpi eq, %95, %98 : vector<8x128xi32>
    %100 = arith.andi %97, %99 : vector<8x128xi1>
    %cst_29 = arith.constant 0.000000e+00 : f32
    %101 = vector.shape_cast %93 : vector<1x1xf32> to vector<1x1xf32>
    %102 = vector.broadcast %101 : vector<1x1xf32> to vector<8x128xf32>
    %103 = vector.broadcast %cst_29 : f32 to vector<8x128xf32>
    %104 = arith.select %100, %102, %103 : vector<8x128xi1>, vector<8x128xf32>
    %c0_30 = arith.constant 0 : index
    %c0_31 = arith.constant 0 : index
    %105 = vector.load %arg3[%c0_30, %c0_31] : memref<8x128xf32, #tpu.memory_space<vmem>>, vector<8x128xf32>
    tpu.vector_store %arg3[%c0_30, %c0_31], %104 {strides = array<i32>} : memref<8x128xf32, #tpu.memory_space<vmem>>, vector<8x128xf32>,
    return
  }
  func.func @transform_0(%arg0: i32) -> (i32, i32) {
    %c0_i32 = arith.constant 0 : i32
    %c0_i32_0 = arith.constant 0 : i32
    return %arg0, %c0_i32 : i32, i32
  }
  func.func @transform_1(%arg0: i32) -> (i32, i32) {
    %c0_i32 = arith.constant 0 : i32
    %c0_i32_0 = arith.constant 0 : i32
    return %arg0, %c0_i32 : i32, i32
  }
  func.func @transform_2(%arg0: i32) -> (i32, i32) {
    %c0_i32 = arith.constant 0 : i32
    %c0_i32_0 = arith.constant 0 : i32
    return %arg0, %c0_i32 : i32, i32
  }
}

</mosaic_0001>

<llo_original>
// kernel: tpu_custom_call.1
$region0: #{tpu_custom_call.1}
  #allocation0 [shape = 'u32[]', space=smem, size = 0x4, offset = 0x4, fixed_abs, tag = 'smem constant byte address 0x4 - core index']
  #allocation1 [shape = 'u32[144,128]{1,0:T(1,128)}', space=vmem, size = 0x12000, scoped, tag = 'internal scratch']
  %s0 = inlined_call_operand.hbm [shape: f32[2,768], index: 0, kind: input, shape index: {}]
  %s1 = inlined_call_operand.hbm [shape: s32[2,256], index: 1, kind: input, shape index: {}]
  %s2 = inlined_call_operand.hbm [shape: f32[8,128], index: 2, kind: output, shape index: {}]
  %s3 = sld [smem:[#allocation0]]
  $region26: #{tpu_custom_call.1} parent=0
    _
  %s5 = ssub.s32 1, %s3
  %s6 = scalar_select 0, %s5, %s3
  $region1: #{tpu_custom_call.1} parent=0
    #allocation2 [shape = 'u8[6144]{0}', space=vmem, size = 0x1800, scoped, tag = 'input window, operand 0, single buffered']
    #allocation3 [shape = 's32[1]{0}', space=sflag, size = 0x4, scoped, tag = 'scoped memory for tpu_custom_call.1']
    #allocation4 [shape = 's32[1]{0}', space=sflag, size = 0x4, scoped, tag = 'scoped memory for tpu_custom_call.1']
    #allocation5 [shape = 'u8[2048]{0}', space=vmem, size = 0x800, scoped, tag = 'input window, operand 1, single buffered']
    #allocation6 [shape = 's32[1]{0}', space=sflag, size = 0x4, scoped, tag = 'scoped memory for tpu_custom_call.1']
    #allocation7 [shape = 'u8[4096]{0}', space=vmem, size = 0x1000, scoped, tag = 'output window, operand 0, single buffered']
    %7 = vsyncpa [#allocation3], 0
    %8 = vsyncpa [#allocation6], 0
    %9 = vsyncpa [#allocation4], 0
    // Predicated region
    $region2: #{tpu_custom_call.1} parent=1 // pred_check
      _
    $region3: #{tpu_custom_call.1} parent=1 // pred_check_branch
      %11 = sbr.rel (0) target = $region5
    $region4: #{tpu_custom_call.1} parent=1 // pred_region
      %s13 = ssub.s32 192, 192
      %14 = vsyncadd [#allocation3], %s13
      %s16 = sshll.u32 [#allocation2], 4
      %s17 = int_to_ptr.vmem [resolvable:$true] %s16
      %19 = dma.hbm_to_vmem [thread:$0]  %s0, 192, %s17, [#allocation3]
    $region5: #{tpu_custom_call.1} parent=1 // pred_fallthru
      _
    // Predicated region
    $region6: #{tpu_custom_call.1} parent=1 // pred_check
      _
    $region7: #{tpu_custom_call.1} parent=1 // pred_check_branch
      %21 = sbr.rel (0) target = $region9
    $region8: #{tpu_custom_call.1} parent=1 // pred_region
      %s23 = ssub.s32 64, 64
      %24 = vsyncadd [#allocation6], %s23
      %s26 = sshll.u32 [#allocation5], 4
      %s27 = int_to_ptr.vmem [resolvable:$true] %s26
      %29 = dma.hbm_to_vmem [thread:$0]  %s1, 64, %s27, [#allocation6]
    $region9: #{tpu_custom_call.1} parent=1 // pred_fallthru
      _
    // Predicated region
    $region10: #{tpu_custom_call.1} parent=1 // pred_check
      _
    $region11: #{tpu_custom_call.1} parent=1 // pred_check_branch
      %31 = sbr.rel (0) target = $region13
    $region12: #{tpu_custom_call.1} parent=1 // pred_region
      %32 = dma.done [#allocation3], 192
    $region13: #{tpu_custom_call.1} parent=1 // pred_fallthru
      _
    // Predicated region
    $region14: #{tpu_custom_call.1} parent=1 // pred_check
      _
    $region15: #{tpu_custom_call.1} parent=1 // pred_check_branch
      %34 = sbr.rel (0) target = $region17
    $region16: #{tpu_custom_call.1} parent=1 // pred_region
      %35 = dma.done [#allocation6], 64
    $region17: #{tpu_custom_call.1} parent=1 // pred_fallthru
      _
    %v36 = vld [vmem:[#allocation5] sm:$0xf]
    %v37 = vld [vmem:[#allocation2] sm:$0xf]
    %v38 = vld [vmem:[#allocation2 + $0x4] sm:$0xf]
    %v39 = vld [vmem:[#allocation2 + $0x8] sm:$0xf]
    %vm40 = vcmp.gt.f32.partialorder %v38, %v37
    %v41 = vsel %vm40, 1, 0
    %v42 = vmax.f32 %v37, %v38
    %vm43 = vcmp.gt.f32.partialorder %v39, %v42
    %v44 = vsel %vm43, 2, %v41
    %vm45 = vcmp.eq.s32.totalorder %v44, %v36
    %vm46 = vcmp.eq.s32.totalorder %v36, 0
    %vm47 = vcmp.eq.s32.totalorder %v44, 0
    %vm48 = vmand %vm46, %vm45
    %v49 = vsel %vm48, 1, 0
    %v50 = vcvt.s32.f32 %v49
    %v53 = vunpack.c.l.s4 1983009808
    %v54 = vunpack.c.0.s8 %v53
    %v55 = vlaneseq
    %v56 = vshrl.u32 %v55, 7
    %v57 = vsub.s32 %v54, %v56
    %v58 = vrot.slane %v50, %v57
    %v59 = vcombine.high %v58, %v58
    %vm62 = vcmask 1041408
    %v63 = vsel %vm62, %v58, 0.0
    %v64 = vsel %vm62, %v59, 0.0
    %v65 = vadd.f32 %v63, %v64
    %66 = vadd.xlane.f32.xlu0 %v65
    %v67 = vpop.xlane.xlu0 %66
    %v68 = vsel %vm46, 1, 0
    %v69 = vcvt.s32.f32 %v68
    %v72 = vunpack.c.l.s4 1983009808
    %v73 = vunpack.c.0.s8 %v72
    %v74 = vlaneseq
    %v75 = vshrl.u32 %v74, 7
    %v76 = vsub.s32 %v73, %v75
    %v77 = vrot.slane %v69, %v76
    %v78 = vcombine.high %v77, %v77
    %v81 = vsel %vm62, %v77, 0.0
    %v82 = vsel %vm62, %v78, 0.0
    %v83 = vadd.f32 %v81, %v82
    %84 = vadd.xlane.f32.xlu0 %v83
    %v85 = vpop.xlane.xlu0 %84
    %v86 = vsel %vm47, 1, 0
    %v87 = vcvt.s32.f32 %v86
    %v90 = vunpack.c.l.s4 1983009808
    %v91 = vunpack.c.0.s8 %v90
    %v92 = vlaneseq
    %v93 = vshrl.u32 %v92, 7
    %v94 = vsub.s32 %v91, %v93
    %v95 = vrot.slane %v87, %v94
    %v96 = vcombine.high %v95, %v95
    %v99 = vsel %vm62, %v95, 0.0
    %v100 = vsel %vm62, %v96, 0.0
    %v101 = vadd.f32 %v99, %v100
    %102 = vadd.xlane.f32.xlu0 %v101
    %v103 = vpop.xlane.xlu0 %102
    %v104 = vadd.f32 %v85, %v103
    %v105 = vsub.f32 %v104, %v67
    %v106 = vadd.f32 %v67, 1.0
    %v107 = vadd.f32 %v105, 1.0
    %v108 = vrcp.pop %v107
    %v109 = vmul.f32 %v106, %v108
    %v110 = vadd.f32 %v109, 0.0
    %vm111 = vcmp.eq.s32.totalorder %v36, 1
    %vm112 = vcmp.eq.s32.totalorder %v44, 1
    %vm113 = vmand %vm111, %vm45
    %v114 = vsel %vm113, 1, 0
    %v115 = vcvt.s32.f32 %v114
    %v118 = vunpack.c.l.s4 1983009808
    %v119 = vunpack.c.0.s8 %v118
    %v120 = vlaneseq
    %v121 = vshrl.u32 %v120, 7
    %v122 = vsub.s32 %v119, %v121
    %v123 = vrot.slane %v115, %v122
    %v124 = vcombine.high %v123, %v123
    %v127 = vsel %vm62, %v123, 0.0
    %v128 = vsel %vm62, %v124, 0.0
    %v129 = vadd.f32 %v127, %v128
    %130 = vadd.xlane.f32.xlu0 %v129
    %v131 = vpop.xlane.xlu0 %130
    %v132 = vsel %vm111, 1, 0
    %v133 = vcvt.s32.f32 %v132
    %v136 = vunpack.c.l.s4 1983009808
    %v137 = vunpack.c.0.s8 %v136
    %v138 = vlaneseq
    %v139 = vshrl.u32 %v138, 7
    %v140 = vsub.s32 %v137, %v139
    %v141 = vrot.slane %v133, %v140
    %v142 = vcombine.high %v141, %v141
    %v145 = vsel %vm62, %v141, 0.0
    %v146 = vsel %vm62, %v142, 0.0
    %v147 = vadd.f32 %v145, %v146
    %148 = vadd.xlane.f32.xlu0 %v147
    %v149 = vpop.xlane.xlu0 %148
    %v150 = vsel %vm112, 1, 0
    %v151 = vcvt.s32.f32 %v150
    %v154 = vunpack.c.l.s4 1983009808
    %v155 = vunpack.c.0.s8 %v154
    %v156 = vlaneseq
    %v157 = vshrl.u32 %v156, 7
    %v158 = vsub.s32 %v155, %v157
    %v159 = vrot.slane %v151, %v158
    %v160 = vcombine.high %v159, %v159
    %v163 = vsel %vm62, %v159, 0.0
    %v164 = vsel %vm62, %v160, 0.0
    %v165 = vadd.f32 %v163, %v164
    %166 = vadd.xlane.f32.xlu0 %v165
    %v167 = vpop.xlane.xlu0 %166
    %v168 = vadd.f32 %v149, %v167
    %v169 = vsub.f32 %v168, %v131
    %v170 = vadd.f32 %v131, 1.0
    %v171 = vadd.f32 %v169, 1.0
    %v172 = vrcp.pop %v171
    %v173 = vmul.f32 %v170, %v172
    %v174 = vadd.f32 %v110, %v173
    %vm175 = vcmp.eq.s32.totalorder %v36, 2
    %vm176 = vcmp.eq.s32.totalorder %v44, 2
    %vm177 = vmand %vm175, %vm45
    %v178 = vsel %vm177, 1, 0
    %v179 = vcvt.s32.f32 %v178
    %v182 = vunpack.c.l.s4 1983009808
    %v183 = vunpack.c.0.s8 %v182
    %v184 = vlaneseq
    %v185 = vshrl.u32 %v184, 7
    %v186 = vsub.s32 %v183, %v185
    %v187 = vrot.slane %v179, %v186
    %v188 = vcombine.high %v187, %v187
    %v191 = vsel %vm62, %v187, 0.0
    %v192 = vsel %vm62, %v188, 0.0
    %v193 = vadd.f32 %v191, %v192
    %194 = vadd.xlane.f32.xlu0 %v193
    %v195 = vpop.xlane.xlu0 %194
    %v196 = vsel %vm175, 1, 0
    %v197 = vcvt.s32.f32 %v196
    %v200 = vunpack.c.l.s4 1983009808
    %v201 = vunpack.c.0.s8 %v200
    %v202 = vlaneseq
    %v203 = vshrl.u32 %v202, 7
    %v204 = vsub.s32 %v201, %v203
    %v205 = vrot.slane %v197, %v204
    %v206 = vcombine.high %v205, %v205
    %v209 = vsel %vm62, %v205, 0.0
    %v210 = vsel %vm62, %v206, 0.0
    %v211 = vadd.f32 %v209, %v210
    %212 = vadd.xlane.f32.xlu0 %v211
    %v213 = vpop.xlane.xlu0 %212
    %v214 = vsel %vm176, 1, 0
    %v215 = vcvt.s32.f32 %v214
    %v218 = vunpack.c.l.s4 1983009808
    %v219 = vunpack.c.0.s8 %v218
    %v220 = vlaneseq
    %v221 = vshrl.u32 %v220, 7
    %v222 = vsub.s32 %v219, %v221
    %v223 = vrot.slane %v215, %v222
    %v224 = vcombine.high %v223, %v223
    %v227 = vsel %vm62, %v223, 0.0
    %v228 = vsel %vm62, %v224, 0.0
    %v229 = vadd.f32 %v227, %v228
    %230 = vadd.xlane.f32.xlu0 %v229
    %v231 = vpop.xlane.xlu0 %230
    %v232 = vadd.f32 %v213, %v231
    %v233 = vsub.f32 %v232, %v195
    %v234 = vadd.f32 %v195, 1.0
    %v235 = vadd.f32 %v233, 1.0
    %v236 = vrcp.pop %v235
    %v237 = vmul.f32 %v234, %v236
    %v238 = vadd.f32 %v174, %v237
    %vm239 = vcmask 1024
    %v240 = vsel %vm239, %v238, 0.0
    %241 = vadd.xlane.f32.xlu0 %v240
    %v242 = vpop.xlane.xlu0 %241
    %v243 = vrot.slane %v242, 4
    %v244 = vadd.f32 %v242, %v243
    %v245 = vrot.slane %v244, 2
    %v246 = vadd.f32 %v244, %v245
    %v247 = vrot.slane %v246, 1
    %v248 = vadd.f32 %v246, %v247
    %s249 = vtos %v248
    %v250 = vlaneseq
    %v251 = vshrl.u32 %v250, 7
    %v252 = vlaneseq
    %v253 = vand.u32 %v252, 127
    %vm254 = vcmp.eq.s32.totalorder %v251, 0
    %vm255 = vcmp.eq.s32.totalorder %v253, 0
    %vm256 = vmand %vm254, %vm255
    %v257 = vstv %s249
    %v258 = vsel %vm256, %v257, 0.0
    %259 = vst [vmem:[#allocation7] sm:$0xff] %v258
    // Predicated region
    $region18: #{tpu_custom_call.1} parent=1 // pred_check
      _
    $region19: #{tpu_custom_call.1} parent=1 // pred_check_branch
      %261 = sbr.rel (0) target = $region21
    $region20: #{tpu_custom_call.1} parent=1 // pred_region
      %s263 = ssub.s32 128, 128
      %264 = vsyncadd [#allocation4], %s263
      %s266 = sshll.u32 [#allocation7], 4
      %s267 = int_to_ptr.vmem [resolvable:$true] %s266
      %269 = dma.vmem_to_hbm [thread:$0]  %s267, 128, %s2, [#allocation4]
    $region21: #{tpu_custom_call.1} parent=1 // pred_fallthru
      _
    // Predicated region
    $region22: #{tpu_custom_call.1} parent=1 // pred_check
      _
    $region23: #{tpu_custom_call.1} parent=1 // pred_check_branch
      %271 = sbr.rel (0) target = $region25
    $region24: #{tpu_custom_call.1} parent=1 // pred_region
      %272 = dma.done [#allocation4], 128
    $region25: #{tpu_custom_call.1} parent=1 // pred_fallthru
      _
    %273 = vsyncpa [#allocation3], 1
    %274 = vsyncpa [#allocation6], 1
    %275 = vsyncpa [#allocation4], 1

</llo_original>
